<compile_context>
chip_gen: v6e
topology: v6e:2x2x1
jax: 0.10.0
libtpu: 0.0.40
codegen_flags: <defaults>
</compile_context>

<pallas_src>
import functools

import jax
import jax.numpy as jnp
from jax.experimental import pallas as pl
from jax.experimental.pallas import tpu as pltpu

LANE = 128
H1 = 128     # fc1 output features
H2 = 64      # fc2 output features
H2P = 128    # fc2 output padded to a full lane width (zero weights/bias)


def _round_up(x, m):
    return (x + m - 1) // m * m


def _cdiv(a, b):
    return -(-a // b)


def _dqn_kernel(x_ref, w1_ref, b1_ref, w2_ref, b2_ref, w3_ref, b3_ref, o_ref):
    # Layer 1: (TB, n_obs) @ (n_obs, 128) + b1 -> ReLU (f32 throughout)
    h1 = jnp.dot(x_ref[...], w1_ref[...], preferred_element_type=jnp.float32)
    h1 = jnp.maximum(h1 + b1_ref[...], 0.0)

    # Layer 2: (TB, 128) @ (128, 128pad) + b2 -> ReLU (padded units stay exactly 0)
    h2 = jnp.dot(h1, w2_ref[...], preferred_element_type=jnp.float32)
    h2 = jnp.maximum(h2 + b2_ref[...], 0.0)

    # Layer 3: (TB, 128pad) @ (128pad, n_actions) + b3 (no activation)
    out = jnp.dot(h2, w3_ref[...], preferred_element_type=jnp.float32)
    o_ref[...] = (out + b3_ref[...]).astype(o_ref.dtype)


def _num_batch_tiles_hint():
    """v7x has 2 TensorCores/chip: keep >=2 batch tiles so both stay busy.
    v5e/v6e have one TC, so a single grid step minimizes per-step overhead."""
    try:
        kind = jax.devices()[0].device_kind.lower()
    except Exception:
        return 1
    return 2 if "v7" in kind else 1


def prepare_params(w1, b1, w2, b2, w3, b3):
    """One-time parameter prep (call when the network's weights change, NOT per
    forward call): f32 cast, (in,out) layout, and zero-padding of hidden2 (64->128)
    so layer-2/3 math is lane-dense.  Padded hidden units have zero weight & bias
    and the matching w3 rows are zero, so results are unchanged."""
    f32 = jnp.float32
    w1p = w1.astype(f32)                                              # (n_obs, 128)
    b1p = b1.reshape(1, -1).astype(f32)                               # (1, 128)
    w2p = jnp.pad(w2.astype(f32), ((0, 0), (0, H2P - H2)))            # (128, 128)
    b2p = jnp.pad(b2.reshape(1, -1).astype(f32), ((0, 0), (0, H2P - H2)))
    w3p = jnp.pad(w3.astype(f32), ((0, H2P - H2), (0, 0)))            # (128, n_actions)
    b3p = b3.reshape(1, -1).astype(f32)                               # (1, n_actions)
    return w1p, b1p, w2p, b2p, w3p, b3p


@functools.partial(jax.jit, static_argnames=("block_batch", "min_tiles"))
def dqn_forward(x, w1, b1, w2, b2, w3, b3, *, block_batch=2048, min_tiles=None):
    """Forward pass. Params must come from prepare_params()."""
    B, n_obs = x.shape
    n_actions = w3.shape[1]
    assert w1.shape == (n_obs, H1) and w2.shape == (H1, H2P) and w3.shape[0] == H2P

    if min_tiles is None:
        min_tiles = _num_batch_tiles_hint()

    # --- Batch tiling: as few, as large tiles as possible (kernel is overhead-
    # bound), but at least `min_tiles` (dual-TC v7x) and >= 8 rows per tile.
    B8 = _round_up(max(B, 1), 8)
    ntiles = max(_cdiv(B8, block_batch), min_tiles)
    ntiles = max(1, min(ntiles, B8 // 8))
    TB = _round_up(_cdiv(B8, ntiles), 8)
    B_pad = TB * ntiles

    x_p = x.astype(jnp.float32)
    if B_pad != B:
        x_p = jnp.pad(x_p, ((0, B_pad - B), (0, 0)))

    flops = 2 * B_pad * (n_obs * H1 + H1 * H2P + H2P * n_actions)
    param_bytes = 4 * (w1.size + b1.size + w2.size + b2.size + w3.size + b3.size)
    bytes_accessed = 4 * (x_p.size + B_pad * n_actions) + param_bytes

    # Real VMEM footprint: double-buffered x/out tiles + weight buffers + f32
    # intermediates (h1/h2), with 2x margin; clamp well under v7x's 64 MiB.
    vmem_need = (2 * TB * (n_obs + n_actions) * 4
                 + 2 * param_bytes
                 + 2 * TB * (H1 + H2P) * 4)
    vmem_limit = int(min(max(2 * vmem_need, 8 << 20), 32 << 20))

    out = pl.pallas_call(
        _dqn_kernel,
        out_shape=jax.ShapeDtypeStruct((B_pad, n_actions), jnp.float32),
        grid=(ntiles,),
        in_specs=[
            pl.BlockSpec((TB, n_obs), lambda i: (i, 0)),        # x: batch-tiled
            pl.BlockSpec((n_obs, H1), lambda i: (0, 0)),        # weights/biases:
            pl.BlockSpec((1, H1), lambda i: (0, 0)),            #   constant index_map
            pl.BlockSpec((H1, H2P), lambda i: (0, 0)),          #   -> DMA'd once,
            pl.BlockSpec((1, H2P), lambda i: (0, 0)),           #   VMEM-resident
            pl.BlockSpec((H2P, n_actions), lambda i: (0, 0)),
            pl.BlockSpec((1, n_actions), lambda i: (0, 0)),
        ],
        # Narrow output: last block dim == full array dim (n_actions) is legal and
        # avoids a 16x zero-padded f32 writeback plus a post-call slice kernel.
        out_specs=pl.BlockSpec((TB, n_actions), lambda i: (i, 0)),
        compiler_params=pltpu.CompilerParams(
            dimension_semantics=("parallel",),
            vmem_limit_bytes=vmem_limit,
        ),
        cost_estimate=pl.CostEstimate(
            flops=flops, transcendentals=0, bytes_accessed=bytes_accessed),
    )(x_p, w1, b1, w2, b2, w3, b3)

    return out if B_pad == B else out[:B]


def init_params(key, n_observations, n_actions):
    """Deterministic PyTorch-style (uniform +/- 1/sqrt(fan_in)) initialization."""
    ks = jax.random.split(key, 6)

    def linear(kw, kb, fan_in, fan_out):
        bound = 1.0 / jnp.sqrt(jnp.float32(fan_in))
        # stored as (in_features, out_features) so the kernel does x @ W
        w = jax.random.uniform(kw, (fan_in, fan_out), jnp.float32, -bound, bound)
        b = jax.random.uniform(kb, (1, fan_out), jnp.float32, -bound, bound)
        return w, b

    w1, b1 = linear(ks[0], ks[1], n_observations, H1)
    w2, b2 = linear(ks[2], ks[3], H1, H2)
    w3, b3 = linear(ks[4], ks[5], H2, n_actions)
    return w1, b1, w2, b2, w3, b3


def reference_forward(x, w1, b1, w2, b2, w3, b3):
    h1 = jnp.maximum(x @ w1 + b1, 0.0)
    h2 = jnp.maximum(h1 @ w2 + b2, 0.0)
    return h2 @ w3 + b3


if __name__ == "__main__":
    key = jax.random.PRNGKey(0)
    batch = 8
    n_observations = 32
    n_actions = 8

    kx, kp = jax.random.split(key)
    x = jax.random.normal(kx, (batch, n_observations), jnp.float32)
    raw_params = init_params(kp, n_observations, n_actions)
    params = prepare_params(*raw_params)      # pad / lay out once, not per call

    out = dqn_forward(x, *params)
    jax.block_until_ready(out)
    ref = reference_forward(x, *raw_params)
    assert out.shape == (batch, n_actions)
    # f32 operands; tolerance covers reduced-precision MXU passes.
    assert jnp.allclose(out, ref, atol=3e-2, rtol=3e-2), (
        float(jnp.max(jnp.abs(out - ref))))

    # Larger batch: a single grid step on v5e/v6e, two batch tiles on v7x.
    x_big = jax.random.normal(jax.random.fold_in(kx, 1),
                              (600, n_observations), jnp.float32)
    out_big = dqn_forward(x_big, *params)
    jax.block_until_ready(out_big)
    ref_big = reference_forward(x_big, *raw_params)
    assert out_big.shape == (600, n_actions)
    assert jnp.allclose(out_big, ref_big, atol=3e-2, rtol=3e-2)

    print("KERNEL_OK")
</pallas_src>

<mosaic_0001>
module attributes {stable_mosaic.version = 11 : i64} {
  func.func @_dqn_kernel(%arg0: i32, %arg1: memref<8x32xf32, #tpu.memory_space<vmem>>, %arg2: memref<32x128xf32, #tpu.memory_space<vmem>>, %arg3: memref<1x128xf32, #tpu.memory_space<vmem>>, %arg4: memref<128x128xf32, #tpu.memory_space<vmem>>, %arg5: memref<1x128xf32, #tpu.memory_space<vmem>>, %arg6: memref<128x8xf32, #tpu.memory_space<vmem>>, %arg7: memref<1x8xf32, #tpu.memory_space<vmem>>, %arg8: memref<8x8xf32, #tpu.memory_space<vmem>>) attributes {dimension_semantics = [#tpu.dimension_semantics<parallel>], iteration_bounds = array<i64: 1>, scalar_prefetch = 0 : i64, scratch_operands = 0 : i64, tpu.core_type = #tpu.core_type<tc>, window_params = [{transform_indices = @transform_0, window_bounds = array<i64: 8, 32>}, {pipeline_mode = #tpu.pipeline_mode<synchronous>, transform_indices = @transform_1, window_bounds = array<i64: 32, 128>}, {pipeline_mode = #tpu.pipeline_mode<synchronous>, transform_indices = @transform_2, window_bounds = array<i64: 1, 128>}, {pipeline_mode = #tpu.pipeline_mode<synchronous>, transform_indices = @transform_3, window_bounds = array<i64: 128, 128>}, {pipeline_mode = #tpu.pipeline_mode<synchronous>, transform_indices = @transform_4, window_bounds = array<i64: 1, 128>}, {pipeline_mode = #tpu.pipeline_mode<synchronous>, transform_indices = @transform_5, window_bounds = array<i64: 128, 8>}, {pipeline_mode = #tpu.pipeline_mode<synchronous>, transform_indices = @transform_6, window_bounds = array<i64: 1, 8>}, {transform_indices = @transform_7, window_bounds = array<i64: 8, 8>}]} {
    %c0 = arith.constant 0 : index
    %c0_0 = arith.constant 0 : index
    %0 = vector.load %arg1[%c0, %c0_0] : memref<8x32xf32, #tpu.memory_space<vmem>>, vector<8x32xf32>
    %c0_1 = arith.constant 0 : index
    %c0_2 = arith.constant 0 : index
    %1 = vector.load %arg2[%c0_1, %c0_2] : memref<32x128xf32, #tpu.memory_space<vmem>>, vector<32x128xf32>
    %cst = arith.constant dense<0.000000e+00> : vector<8x128xf32>
    %2 = tpu.matmul %0, %1, %cst {dimension_numbers = #tpu.dot_dimension_numbers<[1], [0], [0], [1], [0, 0, 1, 1], [], []>} : vector<8x32xf32>, vector<32x128xf32>, vector<8x128xf32> -> vector<8x128xf32>
    %c0_3 = arith.constant 0 : index
    %c0_4 = arith.constant 0 : index
    %3 = vector.load %arg3[%c0_3, %c0_4] : memref<1x128xf32, #tpu.memory_space<vmem>>, vector<1x128xf32>
    %4 = vector.broadcast %3 : vector<1x128xf32> to vector<8x128xf32>
    %5 = arith.addf %2, %4 : vector<8x128xf32>
    %cst_5 = arith.constant 0.000000e+00 : f32
    %6 = vector.broadcast %cst_5 : f32 to vector<8x128xf32>
    %7 = arith.maximumf %5, %6 : vector<8x128xf32>
    %c0_6 = arith.constant 0 : index
    %c0_7 = arith.constant 0 : index
    %8 = vector.load %arg4[%c0_6, %c0_7] : memref<128x128xf32, #tpu.memory_space<vmem>>, vector<128x128xf32>
    %cst_8 = arith.constant dense<0.000000e+00> : vector<8x128xf32>
    %9 = tpu.matmul %7, %8, %cst_8 {dimension_numbers = #tpu.dot_dimension_numbers<[1], [0], [0], [1], [0, 0, 1, 1], [], []>} : vector<8x128xf32>, vector<128x128xf32>, vector<8x128xf32> -> vector<8x128xf32>
    %c0_9 = arith.constant 0 : index
    %c0_10 = arith.constant 0 : index
    %10 = vector.load %arg5[%c0_9, %c0_10] : memref<1x128xf32, #tpu.memory_space<vmem>>, vector<1x128xf32>
    %11 = vector.broadcast %10 : vector<1x128xf32> to vector<8x128xf32>
    %12 = arith.addf %9, %11 : vector<8x128xf32>
    %cst_11 = arith.constant 0.000000e+00 : f32
    %13 = vector.broadcast %cst_11 : f32 to vector<8x128xf32>
    %14 = arith.maximumf %12, %13 : vector<8x128xf32>
    %c0_12 = arith.constant 0 : index
    %c0_13 = arith.constant 0 : index
    %15 = vector.load %arg6[%c0_12, %c0_13] : memref<128x8xf32, #tpu.memory_space<vmem>>, vector<128x8xf32>
    %cst_14 = arith.constant dense<0.000000e+00> : vector<8x8xf32>
    %16 = tpu.matmul %14, %15, %cst_14 {dimension_numbers = #tpu.dot_dimension_numbers<[1], [0], [0], [1], [0, 0, 1, 1], [], []>} : vector<8x128xf32>, vector<128x8xf32>, vector<8x8xf32> -> vector<8x8xf32>
    %c0_15 = arith.constant 0 : index
    %c0_16 = arith.constant 0 : index
    %17 = vector.load %arg7[%c0_15, %c0_16] : memref<1x8xf32, #tpu.memory_space<vmem>>, vector<1x8xf32>
    %18 = vector.broadcast %17 : vector<1x8xf32> to vector<8x8xf32>
    %19 = arith.addf %16, %18 : vector<8x8xf32>
    %c0_17 = arith.constant 0 : index
    %c0_18 = arith.constant 0 : index
    %20 = vector.load %arg8[%c0_17, %c0_18] : memref<8x8xf32, #tpu.memory_space<vmem>>, vector<8x8xf32>
    tpu.vector_store %arg8[%c0_17, %c0_18], %19 {strides = array<i32>} : memref<8x8xf32, #tpu.memory_space<vmem>>, vector<8x8xf32>,
    return
  }
  func.func @transform_0(%arg0: i32) -> (i32, i32) {
    %c0_i32 = arith.constant 0 : i32
    %c0_i32_0 = arith.constant 0 : i32
    return %arg0, %c0_i32 : i32, i32
  }
  func.func @transform_1(%arg0: i32) -> (i32, i32) {
    %c0_i32 = arith.constant 0 : i32
    %c0_i32_0 = arith.constant 0 : i32
    %c0_i32_1 = arith.constant 0 : i32
    return %c0_i32, %c0_i32_0 : i32, i32
  }
  func.func @transform_2(%arg0: i32) -> (i32, i32) {
    %c0_i32 = arith.constant 0 : i32
    %c0_i32_0 = arith.constant 0 : i32
    %c0_i32_1 = arith.constant 0 : i32
    return %c0_i32, %c0_i32_0 : i32, i32
  }
  func.func @transform_3(%arg0: i32) -> (i32, i32) {
    %c0_i32 = arith.constant 0 : i32
    %c0_i32_0 = arith.constant 0 : i32
    %c0_i32_1 = arith.constant 0 : i32
    return %c0_i32, %c0_i32_0 : i32, i32
  }
  func.func @transform_4(%arg0: i32) -> (i32, i32) {
    %c0_i32 = arith.constant 0 : i32
    %c0_i32_0 = arith.constant 0 : i32
    %c0_i32_1 = arith.constant 0 : i32
    return %c0_i32, %c0_i32_0 : i32, i32
  }
  func.func @transform_5(%arg0: i32) -> (i32, i32) {
    %c0_i32 = arith.constant 0 : i32
    %c0_i32_0 = arith.constant 0 : i32
    %c0_i32_1 = arith.constant 0 : i32
    return %c0_i32, %c0_i32_0 : i32, i32
  }
  func.func @transform_6(%arg0: i32) -> (i32, i32) {
    %c0_i32 = arith.constant 0 : i32
    %c0_i32_0 = arith.constant 0 : i32
    %c0_i32_1 = arith.constant 0 : i32
    return %c0_i32, %c0_i32_0 : i32, i32
  }
  func.func @transform_7(%arg0: i32) -> (i32, i32) {
    %c0_i32 = arith.constant 0 : i32
    %c0_i32_0 = arith.constant 0 : i32
    return %arg0, %c0_i32 : i32, i32
  }
}

</mosaic_0001>

<llo_original>
// kernel: dqn_forward.1
$region0: #{dqn_forward.1}
  #allocation0 [shape = 'u32[]', space=smem, size = 0x4, offset = 0x4, fixed_abs, tag = 'smem constant byte address 0x4 - core index']
  #allocation1 [shape = 'u32[144,128]{1,0:T(1,128)}', space=vmem, size = 0x12000, scoped, tag = 'internal scratch']
  %s0 = inlined_call_operand.vmem [shape: f32[8,32], index: 0, kind: input, shape index: {}]
  %s1 = inlined_call_operand.hbm [shape: f32[32,128], index: 1, kind: input, shape index: {}]
  %s2 = inlined_call_operand.vmem [shape: f32[1,128], index: 2, kind: input, shape index: {}]
  %s3 = inlined_call_operand.vmem [shape: f32[128,128], index: 3, kind: input, shape index: {}]
  %s4 = inlined_call_operand.hbm [shape: f32[1,128], index: 4, kind: input, shape index: {}]
  %s5 = inlined_call_operand.vmem [shape: f32[128,8], index: 5, kind: input, shape index: {}]
  %s6 = inlined_call_operand.vmem [shape: f32[1,8], index: 6, kind: input, shape index: {}]
  %s7 = inlined_call_operand.hbm [shape: f32[8,8], index: 7, kind: output, shape index: {}]
  %s8 = sld [smem:[#allocation0]]
  $region46: #{dqn_forward.1} parent=0
    _
  %s10 = ssub.s32 1, %s8
  %s11 = scalar_select 0, %s10, %s8
  $region1: #{dqn_forward.1} parent=0
    #allocation2 [shape = 'u8[16384]{0}', space=vmem, size = 0x4000, scoped, tag = 'input window, operand 1, single buffered']
    #allocation3 [shape = 's32[1]{0}', space=sflag, size = 0x4, scoped, tag = 'scoped memory for dqn_forward.1']
    #allocation4 [shape = 's32[1]{0}', space=sflag, size = 0x4, scoped, tag = 'scoped memory for dqn_forward.1']
    #allocation5 [shape = 'u8[512]{0}', space=vmem, size = 0x400, scoped, tag = 'input window, operand 4, single buffered']
    #allocation6 [shape = 's32[1]{0}', space=sflag, size = 0x4, scoped, tag = 'scoped memory for dqn_forward.1']
    #allocation7 [shape = 'u8[4096]{0}', space=vmem, size = 0x1000, scoped, tag = 'output window, operand 0, single buffered']
    %12 = vsyncpa [#allocation3], 0
    %13 = vsyncpa [#allocation6], 0
    %14 = vsyncpa [#allocation4], 0
    // Predicated region
    $region2: #{dqn_forward.1} parent=1 // pred_check
      _
    $region3: #{dqn_forward.1} parent=1 // pred_check_branch
      %16 = sbr.rel (0) target = $region5
    $region4: #{dqn_forward.1} parent=1 // pred_region
      _
    $region5: #{dqn_forward.1} parent=1 // pred_fallthru
      _
    // Predicated region
    $region6: #{dqn_forward.1} parent=1 // pred_check
      _
    $region7: #{dqn_forward.1} parent=1 // pred_check_branch
      %18 = sbr.rel (0) target = $region9
    $region8: #{dqn_forward.1} parent=1 // pred_region
      %s20 = ssub.s32 512, 512
      %21 = vsyncadd [#allocation3], %s20
      %s22 = sshll.u32 [#allocation2], 4
      %s23 = int_to_ptr.vmem [resolvable:$true] %s22
      %28 = dma.hbm_to_vmem [thread:$0]  %s1, 512, %s23, [#allocation3], 128, 128, 8
    $region9: #{dqn_forward.1} parent=1 // pred_fallthru
      _
    // Predicated region
    $region10: #{dqn_forward.1} parent=1 // pred_check
      _
    $region11: #{dqn_forward.1} parent=1 // pred_check_branch
      %30 = sbr.rel (0) target = $region13
    $region12: #{dqn_forward.1} parent=1 // pred_region
      _
    $region13: #{dqn_forward.1} parent=1 // pred_fallthru
      _
    // Predicated region
    $region14: #{dqn_forward.1} parent=1 // pred_check
      _
    $region15: #{dqn_forward.1} parent=1 // pred_check_branch
      %32 = sbr.rel (0) target = $region17
    $region16: #{dqn_forward.1} parent=1 // pred_region
      _
    $region17: #{dqn_forward.1} parent=1 // pred_fallthru
      _
    // Predicated region
    $region18: #{dqn_forward.1} parent=1 // pred_check
      _
    $region19: #{dqn_forward.1} parent=1 // pred_check_branch
      %34 = sbr.rel (0) target = $region21
    $region20: #{dqn_forward.1} parent=1 // pred_region
      %s36 = ssub.s32 16, 16
      %37 = vsyncadd [#allocation6], %s36
      %s39 = sshll.u32 [#allocation5], 4
      %s40 = int_to_ptr.vmem [resolvable:$true] %s39
      %42 = dma.hbm_to_vmem [thread:$0]  %s4, 16, %s40, [#allocation6]
    $region21: #{dqn_forward.1} parent=1 // pred_fallthru
      _
    // Predicated region
    $region22: #{dqn_forward.1} parent=1 // pred_check
      _
    $region23: #{dqn_forward.1} parent=1 // pred_check_branch
      %44 = sbr.rel (0) target = $region25
    $region24: #{dqn_forward.1} parent=1 // pred_region
      _
    $region25: #{dqn_forward.1} parent=1 // pred_fallthru
      _
    // Predicated region
    $region26: #{dqn_forward.1} parent=1 // pred_check
      _
    $region27: #{dqn_forward.1} parent=1 // pred_check_branch
      %46 = sbr.rel (0) target = $region29
    $region28: #{dqn_forward.1} parent=1 // pred_region
      _
    $region29: #{dqn_forward.1} parent=1 // pred_fallthru
      _
    // Predicated region
    $region30: #{dqn_forward.1} parent=1 // pred_check
      _
    $region31: #{dqn_forward.1} parent=1 // pred_check_branch
      %48 = sbr.rel (0) target = $region33
    $region32: #{dqn_forward.1} parent=1 // pred_region
      %49 = dma.done [#allocation3], 512
    $region33: #{dqn_forward.1} parent=1 // pred_fallthru
      _
    // Predicated region
    $region34: #{dqn_forward.1} parent=1 // pred_check
      _
    $region35: #{dqn_forward.1} parent=1 // pred_check_branch
      %51 = sbr.rel (0) target = $region37
    $region36: #{dqn_forward.1} parent=1 // pred_region
      %52 = dma.done [#allocation6], 16
    $region37: #{dqn_forward.1} parent=1 // pred_fallthru
      _
    %v53 = vld [vmem:[%s0] sm:$0xff]
    %v54 = vld [vmem:[#allocation2] sm:$0xff]
    %v55 = vld [vmem:[#allocation2 + $0x8] sm:$0xff]
    %v56 = vld [vmem:[#allocation2 + $0x10] sm:$0xff]
    %v57 = vld [vmem:[#allocation2 + $0x18] sm:$0xff]
    %v58 = vld [vmem:[%s2] sm:$0x1]
    %v60 = vlaneseq
    %v61 = vshrl.u32 %v60, 7
    %v62 = vsub.s32 0, %v61
    %v63 = vrot.slane %v58, %v62
    %vm65 = vcmask 261120
    %v67 = vsel %vm65, %v53, 0
    %69 = vmatprep.subr.mxu0 0.0
    %70 = vmatpush1.msra.mxu0 0.0
    %71 = vmatprep.subr.mxu0 0.0
    %72 = vmatpush1.msra.mxu0 0.0
    %73 = vmatprep.subr.mxu0 0.0
    %74 = vmatpush1.msra.mxu0 0.0
    %75 = vmatprep.subr.mxu0 0.0
    %76 = vmatpush1.msra.mxu0 0.0
    %77 = vmatprep.subr.mxu0 0.0
    %78 = vmatpush1.msra.mxu0 0.0
    %79 = vmatprep.subr.mxu0 0.0
    %80 = vmatpush1.msra.mxu0 0.0
    %81 = vmatprep.subr.mxu0 0.0
    %82 = vmatpush1.msra.mxu0 0.0
    %83 = vmatprep.subr.mxu0 0.0
    %84 = vmatpush1.msra.mxu0 0.0
    %85 = vmatprep.subr.mxu0 0.0
    %86 = vmatpush1.msra.mxu0 0.0
    %87 = vmatprep.subr.mxu0 0.0
    %88 = vmatpush1.msra.mxu0 0.0
    %89 = vmatprep.subr.mxu0 0.0
    %90 = vmatpush1.msra.mxu0 0.0
    %91 = vmatprep.subr.mxu0 0.0
    %92 = vmatpush1.msra.mxu0 0.0
    %93 = vmatprep.subr.mxu0 0.0
    %94 = vmatpush1.msra.mxu0 %v57
    %95 = vmatprep.subr.mxu0 0.0
    %96 = vmatpush1.msra.mxu0 %v56
    %97 = vmatprep.subr.mxu0 0.0
    %98 = vmatpush1.msra.mxu0 %v55
    %99 = vmatprep.subr.mxu0 0.0
    %100 = vmatpush1.msra.mxu0 %v54
    %101 = vmatprep.subr.mxu0 0.0
    %102 = vmatpush2.msra.mxu0 0.0
    %103 = vmatprep.subr.mxu0 0.0
    %104 = vmatpush2.msra.mxu0 0.0
    %105 = vmatprep.subr.mxu0 0.0
    %106 = vmatpush2.msra.mxu0 0.0
    %107 = vmatprep.subr.mxu0 0.0
    %108 = vmatpush2.msra.mxu0 0.0
    %109 = vmatprep.subr.mxu0 0.0
    %110 = vmatpush2.msra.mxu0 0.0
    %111 = vmatprep.subr.mxu0 0.0
    %112 = vmatpush2.msra.mxu0 0.0
    %113 = vmatprep.subr.mxu0 0.0
    %114 = vmatpush2.msra.mxu0 0.0
    %115 = vmatprep.subr.mxu0 0.0
    %116 = vmatpush2.msra.mxu0 0.0
    %117 = vmatprep.subr.mxu0 0.0
    %118 = vmatpush2.msra.mxu0 0.0
    %119 = vmatprep.subr.mxu0 0.0
    %120 = vmatpush2.msra.mxu0 0.0
    %121 = vmatprep.subr.mxu0 0.0
    %122 = vmatpush2.msra.mxu0 0.0
    %123 = vmatprep.subr.mxu0 0.0
    %124 = vmatpush2.msra.mxu0 0.0
    %125 = vmatprep.subr.mxu0 0.0
    %126 = vmatpush2.msra.mxu0 0.0
    %127 = vmatprep.subr.mxu0 0.0
    %128 = vmatpush2.msra.mxu0 0.0
    %129 = vmatprep.subr.mxu0 0.0
    %130 = vmatpush2.msra.mxu0 0.0
    %131 = vmatprep.subr.mxu0 0.0
    %132 = vmatpush2.msra.mxu0 0.0
    %133 = vmatprep.mubr.f32.mxu0 0.0
    %134 = vmatmul.mubr.f32.gmra.mxu0 %v67
    %v135 = vpop.f32.mrf.mxu0
    %v136 = vadd.f32 %v63, %v135
    %v137 = vpop.f32.mrf.mxu0
    %138 = vdwg.mxu0
    %v139 = vmax.f32 %v136, 0.0
    %v140 = vld [vmem:[%s3] sm:$0xff]
    %v141 = vld [vmem:[%s3 + $0x8] sm:$0xff]
    %v142 = vld [vmem:[%s3 + $0x10] sm:$0xff]
    %v143 = vld [vmem:[%s3 + $0x18] sm:$0xff]
    %v144 = vld [vmem:[%s3 + $0x20] sm:$0xff]
    %v145 = vld [vmem:[%s3 + $0x28] sm:$0xff]
    %v146 = vld [vmem:[%s3 + $0x30] sm:$0xff]
    %v147 = vld [vmem:[%s3 + $0x38] sm:$0xff]
    %v148 = vld [vmem:[%s3 + $0x40] sm:$0xff]
    %v149 = vld [vmem:[%s3 + $0x48] sm:$0xff]
    %v150 = vld [vmem:[%s3 + $0x50] sm:$0xff]
    %v151 = vld [vmem:[%s3 + $0x58] sm:$0xff]
    %v152 = vld [vmem:[%s3 + $0x60] sm:$0xff]
    %v153 = vld [vmem:[%s3 + $0x68] sm:$0xff]
    %v154 = vld [vmem:[%s3 + $0x70] sm:$0xff]
    %v155 = vld [vmem:[%s3 + $0x78] sm:$0xff]
    %v156 = vld [vmem:[#allocation5] sm:$0x1]
    %v158 = vlaneseq
    %v159 = vshrl.u32 %v158, 7
    %v160 = vsub.s32 0, %v159
    %v161 = vrot.slane %v156, %v160
    %163 = vmatprep.subr.mxu0 0.0
    %164 = vmatpush1.msra.mxu0 %v155
    %165 = vmatprep.subr.mxu0 0.0
    %166 = vmatpush1.msra.mxu0 %v154
    %167 = vmatprep.subr.mxu0 0.0
    %168 = vmatpush1.msra.mxu0 %v153
    %169 = vmatprep.subr.mxu0 0.0
    %170 = vmatpush1.msra.mxu0 %v152
    %171 = vmatprep.subr.mxu0 0.0
    %172 = vmatpush1.msra.mxu0 %v151
    %173 = vmatprep.subr.mxu0 0.0
    %174 = vmatpush1.msra.mxu0 %v150
    %175 = vmatprep.subr.mxu0 0.0
    %176 = vmatpush1.msra.mxu0 %v149
    %177 = vmatprep.subr.mxu0 0.0
    %178 = vmatpush1.msra.mxu0 %v148
    %179 = vmatprep.subr.mxu0 0.0
    %180 = vmatpush1.msra.mxu0 %v147
    %181 = vmatprep.subr.mxu0 0.0
    %182 = vmatpush1.msra.mxu0 %v146
    %183 = vmatprep.subr.mxu0 0.0
    %184 = vmatpush1.msra.mxu0 %v145
    %185 = vmatprep.subr.mxu0 0.0
    %186 = vmatpush1.msra.mxu0 %v144
    %187 = vmatprep.subr.mxu0 0.0
    %188 = vmatpush1.msra.mxu0 %v143
    %189 = vmatprep.subr.mxu0 0.0
    %190 = vmatpush1.msra.mxu0 %v142
    %191 = vmatprep.subr.mxu0 0.0
    %192 = vmatpush1.msra.mxu0 %v141
    %193 = vmatprep.subr.mxu0 0.0
    %194 = vmatpush1.msra.mxu0 %v140
    %195 = vmatprep.subr.mxu0 0.0
    %196 = vmatpush2.msra.mxu0 0.0
    %197 = vmatprep.subr.mxu0 0.0
    %198 = vmatpush2.msra.mxu0 0.0
    %199 = vmatprep.subr.mxu0 0.0
    %200 = vmatpush2.msra.mxu0 0.0
    %201 = vmatprep.subr.mxu0 0.0
    %202 = vmatpush2.msra.mxu0 0.0
    %203 = vmatprep.subr.mxu0 0.0
    %204 = vmatpush2.msra.mxu0 0.0
    %205 = vmatprep.subr.mxu0 0.0
    %206 = vmatpush2.msra.mxu0 0.0
    %207 = vmatprep.subr.mxu0 0.0
    %208 = vmatpush2.msra.mxu0 0.0
    %209 = vmatprep.subr.mxu0 0.0
    %210 = vmatpush2.msra.mxu0 0.0
    %211 = vmatprep.subr.mxu0 0.0
    %212 = vmatpush2.msra.mxu0 0.0
    %213 = vmatprep.subr.mxu0 0.0
    %214 = vmatpush2.msra.mxu0 0.0
    %215 = vmatprep.subr.mxu0 0.0
    %216 = vmatpush2.msra.mxu0 0.0
    %217 = vmatprep.subr.mxu0 0.0
    %218 = vmatpush2.msra.mxu0 0.0
    %219 = vmatprep.subr.mxu0 0.0
    %220 = vmatpush2.msra.mxu0 0.0
    %221 = vmatprep.subr.mxu0 0.0
    %222 = vmatpush2.msra.mxu0 0.0
    %223 = vmatprep.subr.mxu0 0.0
    %224 = vmatpush2.msra.mxu0 0.0
    %225 = vmatprep.subr.mxu0 0.0
    %226 = vmatpush2.msra.mxu0 0.0
    %227 = vmatprep.mubr.f32.mxu0 0.0
    %228 = vmatmul.mubr.f32.gmra.mxu0 %v139
    %v229 = vpop.f32.mrf.mxu0
    %v230 = vadd.f32 %v161, %v229
    %v231 = vpop.f32.mrf.mxu0
    %232 = vdwg.mxu0
    %v233 = vmax.f32 %v230, 0.0
    %v234 = vld [vmem:[%s5] sm:$0xff]
    %v235 = vld [vmem:[%s5 + $0x8] sm:$0xff]
    %v236 = vld [vmem:[%s5 + $0x10] sm:$0xff]
    %v237 = vld [vmem:[%s5 + $0x18] sm:$0xff]
    %v238 = vld [vmem:[%s5 + $0x20] sm:$0xff]
    %v239 = vld [vmem:[%s5 + $0x28] sm:$0xff]
    %v240 = vld [vmem:[%s5 + $0x30] sm:$0xff]
    %v241 = vld [vmem:[%s5 + $0x38] sm:$0xff]
    %v242 = vld [vmem:[%s5 + $0x40] sm:$0xff]
    %v243 = vld [vmem:[%s5 + $0x48] sm:$0xff]
    %v244 = vld [vmem:[%s5 + $0x50] sm:$0xff]
    %v245 = vld [vmem:[%s5 + $0x58] sm:$0xff]
    %v246 = vld [vmem:[%s5 + $0x60] sm:$0xff]
    %v247 = vld [vmem:[%s5 + $0x68] sm:$0xff]
    %v248 = vld [vmem:[%s5 + $0x70] sm:$0xff]
    %v249 = vld [vmem:[%s5 + $0x78] sm:$0xff]
    %v250 = vld [vmem:[%s6] sm:$0x1]
    %v252 = vlaneseq
    %v253 = vshrl.u32 %v252, 7
    %v254 = vsub.s32 0, %v253
    %v255 = vrot.slane %v250, %v254
    %257 = vmatprep.subr.mxu0 0.0
    %258 = vmatpush1.msra.mxu0 %v249
    %259 = vmatprep.subr.mxu0 0.0
    %260 = vmatpush1.msra.mxu0 %v248
    %261 = vmatprep.subr.mxu0 0.0
    %262 = vmatpush1.msra.mxu0 %v247
    %263 = vmatprep.subr.mxu0 0.0
    %264 = vmatpush1.msra.mxu0 %v246
    %265 = vmatprep.subr.mxu0 0.0
    %266 = vmatpush1.msra.mxu0 %v245
    %267 = vmatprep.subr.mxu0 0.0
    %268 = vmatpush1.msra.mxu0 %v244
    %269 = vmatprep.subr.mxu0 0.0
    %270 = vmatpush1.msra.mxu0 %v243
    %271 = vmatprep.subr.mxu0 0.0
    %272 = vmatpush1.msra.mxu0 %v242
    %273 = vmatprep.subr.mxu0 0.0
    %274 = vmatpush1.msra.mxu0 %v241
    %275 = vmatprep.subr.mxu0 0.0
    %276 = vmatpush1.msra.mxu0 %v240
    %277 = vmatprep.subr.mxu0 0.0
    %278 = vmatpush1.msra.mxu0 %v239
    %279 = vmatprep.subr.mxu0 0.0
    %280 = vmatpush1.msra.mxu0 %v238
    %281 = vmatprep.subr.mxu0 0.0
    %282 = vmatpush1.msra.mxu0 %v237
    %283 = vmatprep.subr.mxu0 0.0
    %284 = vmatpush1.msra.mxu0 %v236
    %285 = vmatprep.subr.mxu0 0.0
    %286 = vmatpush1.msra.mxu0 %v235
    %287 = vmatprep.subr.mxu0 0.0
    %288 = vmatpush1.msra.mxu0 %v234
    %289 = vmatprep.subr.mxu0 0.0
    %290 = vmatpush2.msra.mxu0 0.0
    %291 = vmatprep.subr.mxu0 0.0
    %292 = vmatpush2.msra.mxu0 0.0
    %293 = vmatprep.subr.mxu0 0.0
    %294 = vmatpush2.msra.mxu0 0.0
    %295 = vmatprep.subr.mxu0 0.0
    %296 = vmatpush2.msra.mxu0 0.0
    %297 = vmatprep.subr.mxu0 0.0
    %298 = vmatpush2.msra.mxu0 0.0
    %299 = vmatprep.subr.mxu0 0.0
    %300 = vmatpush2.msra.mxu0 0.0
    %301 = vmatprep.subr.mxu0 0.0
    %302 = vmatpush2.msra.mxu0 0.0
    %303 = vmatprep.subr.mxu0 0.0
    %304 = vmatpush2.msra.mxu0 0.0
    %305 = vmatprep.subr.mxu0 0.0
    %306 = vmatpush2.msra.mxu0 0.0
    %307 = vmatprep.subr.mxu0 0.0
    %308 = vmatpush2.msra.mxu0 0.0
    %309 = vmatprep.subr.mxu0 0.0
    %310 = vmatpush2.msra.mxu0 0.0
    %311 = vmatprep.subr.mxu0 0.0
    %312 = vmatpush2.msra.mxu0 0.0
    %313 = vmatprep.subr.mxu0 0.0
    %314 = vmatpush2.msra.mxu0 0.0
    %315 = vmatprep.subr.mxu0 0.0
    %316 = vmatpush2.msra.mxu0 0.0
    %317 = vmatprep.subr.mxu0 0.0
    %318 = vmatpush2.msra.mxu0 0.0
    %319 = vmatprep.subr.mxu0 0.0
    %320 = vmatpush2.msra.mxu0 0.0
    %321 = vmatprep.mubr.f32.mxu0 0.0
    %322 = vmatmul.mubr.f32.gmra.mxu0 %v233
    %v323 = vpop.f32.mrf.mxu0
    %v324 = vadd.f32 %v255, %v323
    %v325 = vpop.f32.mrf.mxu0
    %326 = vdwg.mxu0
    %vm327 = vcmask 64512
    %328 = vst.msk [vmem:[#allocation7] sm:$0xff] %vm327, %v324
    // Predicated region
    $region38: #{dqn_forward.1} parent=1 // pred_check
      _
    $region39: #{dqn_forward.1} parent=1 // pred_check_branch
      %330 = sbr.rel (0) target = $region41
    $region40: #{dqn_forward.1} parent=1 // pred_region
      %s332 = ssub.s32 128, 128
      %333 = vsyncadd [#allocation4], %s332
      %s335 = sshll.u32 [#allocation7], 4
      %s336 = int_to_ptr.vmem [resolvable:$true] %s335
      %338 = dma.vmem_to_hbm [thread:$0]  %s336, 128, %s7, [#allocation4]
    $region41: #{dqn_forward.1} parent=1 // pred_fallthru
      _
    // Predicated region
    $region42: #{dqn_forward.1} parent=1 // pred_check
      _
    $region43: #{dqn_forward.1} parent=1 // pred_check_branch
      %340 = sbr.rel (0) target = $region45
    $region44: #{dqn_forward.1} parent=1 // pred_region
      %341 = dma.done [#allocation4], 128
    $region45: #{dqn_forward.1} parent=1 // pred_fallthru
      _
    %342 = vsyncpa [#allocation3], 1
    %343 = vsyncpa [#allocation6], 1
    %344 = vsyncpa [#allocation4], 1

</llo_original>
